<compile_context>
chip_gen: v7x
topology: tpu7x:2x2x1
jax: 0.10.0
libtpu: 0.0.40
codegen_flags: <defaults>
</compile_context>

<pallas_src>
import functools

import jax
import jax.numpy as jnp
from jax.experimental import pallas as pl
from jax.experimental.pallas import tpu as pltpu

HIDDEN = 1024        # BERT-large hidden size (fixed by Linear(1024, 256))
MID = 256
NUM_CLASSES = 2
OUT_PAD = 128        # lane-dense padded class width

# VMEM budget (bytes) for the double-buffered streamed hidden tile; sized so
# the kernel also fits v7x (64 MiB physical / 32 MiB scoped default).
_STREAM_BUDGET_BYTES = 24 * 1024 * 1024


def _domain_head_kernel(h_ref, w1_ref, b1_ref, w2_ref, b2_ref, out_ref,
                        acc_ref, *, inv_s, num_classes, seq_len, seq_tile,
                        mask_tail):
    s = pl.program_id(1)

    @pl.when(s == 0)
    def _():
        acc_ref[...] = jnp.zeros_like(acc_ref)

    # Streaming sum-pool over the sequence tile (upcast to f32 for accuracy).
    tile = h_ref[...].astype(jnp.float32)                      # (TB, TS, H)
    if mask_tail:
        # Last seq block extends past S: zero the padded (garbage) rows.
        pos = s * seq_tile + jax.lax.broadcasted_iota(
            jnp.int32, (1, seq_tile, 1), 1)
        tile = jnp.where(pos < seq_len, tile, 0.0)
    acc_ref[...] += jnp.sum(tile, axis=1)                       # (TB, H)

    @pl.when(s == pl.num_programs(1) - 1)
    def _():
        # Mean = running sum * (1/S).
        pooled = acc_ref[...] * inv_s                                  # (TB, H)
        z1 = jnp.dot(pooled, w1_ref[...],
                     preferred_element_type=jnp.float32) + b1_ref[...]  # (TB, 256)
        a1 = jnp.tanh(z1)
        # Dropout(0.1): identity at inference (eval mode).
        logits = jnp.dot(a1, w2_ref[...],
                         preferred_element_type=jnp.float32) + b2_ref[...]  # (TB, 128)
        # Padded class lanes must not contribute to the log-softmax normalizer.
        lane = jax.lax.broadcasted_iota(jnp.int32, logits.shape, 1)
        logits = jnp.where(lane < num_classes, logits, -jnp.inf)
        m = jnp.max(logits, axis=1, keepdims=True)
        shifted = logits - m
        lse = jnp.log(jnp.sum(jnp.exp(shifted), axis=1, keepdims=True))
        out_ref[...] = shifted - lse


def _pick_batch_tile(batch):
    for tb in (32, 16, 8):
        if batch % tb == 0:
            return tb
    return batch  # small / odd batches: single block (equals full dim -> legal)


def _pick_seq_tile(seq, max_rows):
    # Largest power-of-two tile that fits the VMEM streaming budget.
    ts = 8
    for t in (1024, 512, 256, 128, 64, 32, 16, 8):
        if t <= max_rows:
            ts = t
            break
    if seq <= ts:
        return seq  # single full-sequence block (full-dim block is always legal)
    # Prefer an exact divisor of comparable size to avoid tail masking.
    for t in (1024, 512, 256, 128, 64, 32, 16, 8):
        if t <= ts and 2 * t >= ts and seq % t == 0:
            return t
    return ts  # non-divisible: cdiv grid + in-kernel tail mask


def domain_classifier_head(hidden_state, w1, b1, w2, b2, *, seq_tile=None):
    """hidden_state: (B, S, 1024) f32 or bf16; returns (B, 2) log-probs (f32)."""
    B, S, H = hidden_state.shape
    assert H == HIDDEN
    itemsize = jnp.dtype(hidden_state.dtype).itemsize

    TB = _pick_batch_tile(B)
    max_rows = max(8, _STREAM_BUDGET_BYTES // (2 * TB * HIDDEN * itemsize))
    TS = seq_tile if seq_tile is not None else _pick_seq_tile(S, max_rows)
    mask_tail = (S % TS) != 0
    grid = (B // TB, pl.cdiv(S, TS))

    # Prepare params: f32, biases as (1, N); pad the 256->2 projection to 128
    # lanes so the output store is lane-dense (padded lanes masked in-kernel).
    w1f = w1.astype(jnp.float32)
    b1f = b1.astype(jnp.float32).reshape(1, MID)
    w2p = jnp.zeros((MID, OUT_PAD), jnp.float32).at[:, :NUM_CLASSES].set(
        w2.astype(jnp.float32))
    b2p = jnp.zeros((1, OUT_PAD), jnp.float32).at[:, :NUM_CLASSES].set(
        b2.astype(jnp.float32).reshape(1, NUM_CLASSES))

    vmem_bytes = (
        2 * TB * TS * HIDDEN * itemsize          # double-buffered hidden tiles
        + (HIDDEN * MID + MID) * 4               # w1, b1 (resident)
        + (MID * OUT_PAD + OUT_PAD) * 4          # padded w2, b2 (resident)
        + TB * HIDDEN * 4                        # sum-pool accumulator scratch
        + 2 * TB * OUT_PAD * 4                   # output block
    )

    kernel = functools.partial(
        _domain_head_kernel, inv_s=1.0 / S, num_classes=NUM_CLASSES,
        seq_len=S, seq_tile=TS, mask_tail=mask_tail)

    out_padded = pl.pallas_call(
        kernel,
        out_shape=jax.ShapeDtypeStruct((B, OUT_PAD), jnp.float32),
        grid_spec=pltpu.PrefetchScalarGridSpec(
            num_scalar_prefetch=0,
            grid=grid,
            in_specs=[
                pl.BlockSpec((TB, TS, HIDDEN), lambda b, s: (b, s, 0)),
                pl.BlockSpec((HIDDEN, MID), lambda b, s: (0, 0)),
                pl.BlockSpec((1, MID), lambda b, s: (0, 0)),
                pl.BlockSpec((MID, OUT_PAD), lambda b, s: (0, 0)),
                pl.BlockSpec((1, OUT_PAD), lambda b, s: (0, 0)),
            ],
            out_specs=pl.BlockSpec((TB, OUT_PAD), lambda b, s: (b, 0)),
            scratch_shapes=[pltpu.VMEM((TB, HIDDEN), jnp.float32)],
        ),
        compiler_params=pltpu.CompilerParams(
            dimension_semantics=("parallel", "arbitrary"),
            vmem_limit_bytes=int(vmem_bytes) + (8 << 20),
        ),
        cost_estimate=pl.CostEstimate(
            flops=B * S * HIDDEN + 2 * B * (HIDDEN * MID + MID * OUT_PAD),
            transcendentals=B * (MID + OUT_PAD),
            bytes_accessed=(B * S * HIDDEN * itemsize
                            + (HIDDEN * MID + MID * OUT_PAD) * 4
                            + B * OUT_PAD * 4),
        ),
    )(hidden_state, w1f, b1f, w2p, b2p)

    return out_padded[:, :NUM_CLASSES]


def init_params(key):
    """Deterministic synthetic parameters with the module's shapes."""
    k1, k2, k3, k4 = jax.random.split(key, 4)
    # PyTorch nn.Linear default: U(-1/sqrt(fan_in), 1/sqrt(fan_in))
    lim1 = 1.0 / (HIDDEN ** 0.5)
    lim2 = 1.0 / (MID ** 0.5)
    w1 = jax.random.uniform(k1, (HIDDEN, MID), jnp.float32, -lim1, lim1)
    b1 = jax.random.uniform(k2, (1, MID), jnp.float32, -lim1, lim1)
    w2 = jax.random.uniform(k3, (MID, NUM_CLASSES), jnp.float32, -lim2, lim2)
    b2 = jax.random.uniform(k4, (1, NUM_CLASSES), jnp.float32, -lim2, lim2)
    return w1, b1, w2, b2


def _reference(hidden_f32, w1, b1, w2, b2):
    pooled = hidden_f32.mean(axis=1)
    return jax.nn.log_softmax(jnp.tanh(pooled @ w1 + b1) @ w2 + b2, axis=1)


if __name__ == "__main__":
    key = jax.random.PRNGKey(0)
    k_h, k_p, k_h2 = jax.random.split(key, 3)

    B, S = 2, 8  # small batch / sequence; hidden must be 1024 per the module
    hidden_state = jax.random.normal(k_h, (B, S, HIDDEN), jnp.float32)
    w1, b1, w2, b2 = init_params(k_p)

    # f32 path (single full-sequence block)
    out = domain_classifier_head(hidden_state, w1, b1, w2, b2)
    out = jax.block_until_ready(out)
    ref = _reference(hidden_state, w1, b1, w2, b2)
    assert out.shape == (B, NUM_CLASSES)
    assert bool(jnp.allclose(out, ref, atol=1e-4, rtol=1e-4))

    # bf16 streaming path (halves HBM traffic; f32 accumulation in-kernel)
    hidden_bf16 = hidden_state.astype(jnp.bfloat16)
    out_bf16 = jax.block_until_ready(
        domain_classifier_head(hidden_bf16, w1, b1, w2, b2))
    ref_bf16 = _reference(hidden_bf16.astype(jnp.float32), w1, b1, w2, b2)
    assert out_bf16.shape == (B, NUM_CLASSES)
    assert bool(jnp.allclose(out_bf16, ref_bf16, atol=5e-2, rtol=5e-2))

    # Non-divisible sequence path: cdiv grid + in-kernel tail masking
    S_odd = 12
    hidden_odd = jax.random.normal(k_h2, (B, S_odd, HIDDEN), jnp.float32)
    out_odd = jax.block_until_ready(
        domain_classifier_head(hidden_odd, w1, b1, w2, b2, seq_tile=8))
    ref_odd = _reference(hidden_odd, w1, b1, w2, b2)
    assert out_odd.shape == (B, NUM_CLASSES)
    assert bool(jnp.allclose(out_odd, ref_odd, atol=1e-4, rtol=1e-4))

    print("KERNEL_OK")
</pallas_src>

<mosaic_0001>
module attributes {stable_mosaic.version = 11 : i64} {
  func.func @_domain_head_kernel(%arg0: i32, %arg1: i32, %arg2: memref<2x8x1024xf32, #tpu.memory_space<vmem>>, %arg3: memref<1024x256xf32, #tpu.memory_space<vmem>>, %arg4: memref<1x256xf32, #tpu.memory_space<vmem>>, %arg5: memref<256x128xf32, #tpu.memory_space<vmem>>, %arg6: memref<1x128xf32, #tpu.memory_space<vmem>>, %arg7: memref<2x128xf32, #tpu.memory_space<vmem>>, %arg8: memref<2x1024xf32, #tpu.memory_space<vmem>>) attributes {dimension_semantics = [#tpu.dimension_semantics<parallel>, #tpu.dimension_semantics<arbitrary>], iteration_bounds = array<i64: 1, 1>, scalar_prefetch = 0 : i64, scratch_operands = 1 : i64, tpu.core_type = #tpu.core_type<tc>, window_params = [{transform_indices = @transform_0, window_bounds = array<i64: 2, 8, 1024>}, {pipeline_mode = #tpu.pipeline_mode<synchronous>, transform_indices = @transform_1, window_bounds = array<i64: 1024, 256>}, {pipeline_mode = #tpu.pipeline_mode<synchronous>, transform_indices = @transform_2, window_bounds = array<i64: 1, 256>}, {pipeline_mode = #tpu.pipeline_mode<synchronous>, transform_indices = @transform_3, window_bounds = array<i64: 256, 128>}, {pipeline_mode = #tpu.pipeline_mode<synchronous>, transform_indices = @transform_4, window_bounds = array<i64: 1, 128>}, {transform_indices = @transform_5, window_bounds = array<i64: 2, 128>}]} {
    %c0_i32 = arith.constant 0 : i32
    %0 = arith.cmpi eq, %arg1, %c0_i32 : i32
    %1 = arith.extui %0 : i1 to i32
    %c0_i32_0 = arith.constant 0 : i32
    %2 = arith.cmpi ne, %1, %c0_i32_0 : i32
    scf.if %2 {
      %cst_9 = arith.constant 0.000000e+00 : f32
      %11 = vector.broadcast %cst_9 : f32 to vector<2x1024xf32>
      %c0_10 = arith.constant 0 : index
      %c0_11 = arith.constant 0 : index
      %12 = vector.load %arg8[%c0_10, %c0_11] : memref<2x1024xf32, #tpu.memory_space<vmem>>, vector<2x1024xf32>
      tpu.vector_store %arg8[%c0_10, %c0_11], %11 {strides = array<i32>} : memref<2x1024xf32, #tpu.memory_space<vmem>>, vector<2x1024xf32>,
    } else {
    }
    %c0 = arith.constant 0 : index
    %c0_1 = arith.constant 0 : index
    %c0_2 = arith.constant 0 : index
    %3 = vector.load %arg2[%c0, %c0_1, %c0_2] : memref<2x8x1024xf32, #tpu.memory_space<vmem>>, vector<2x8x1024xf32>
    %c0_3 = arith.constant 0 : index
    %c0_4 = arith.constant 0 : index
    %4 = vector.load %arg8[%c0_3, %c0_4] : memref<2x1024xf32, #tpu.memory_space<vmem>>, vector<2x1024xf32>
    %cst = arith.constant dense<0.000000e+00> : vector<2x1024xf32>
    %5 = vector.multi_reduction <add>, %3, %cst [1] : vector<2x8x1024xf32> to vector<2x1024xf32>
    %6 = arith.addf %4, %5 : vector<2x1024xf32>
    %c0_5 = arith.constant 0 : index
    %c0_6 = arith.constant 0 : index
    %7 = vector.load %arg8[%c0_5, %c0_6] : memref<2x1024xf32, #tpu.memory_space<vmem>>, vector<2x1024xf32>
    tpu.vector_store %arg8[%c0_5, %c0_6], %6 {strides = array<i32>} : memref<2x1024xf32, #tpu.memory_space<vmem>>, vector<2x1024xf32>,
    %c0_i32_7 = arith.constant 0 : i32
    %8 = arith.cmpi eq, %arg1, %c0_i32_7 : i32
    %9 = arith.extui %8 : i1 to i32
    %c0_i32_8 = arith.constant 0 : i32
    %10 = arith.cmpi ne, %9, %c0_i32_8 : i32
    scf.if %10 {
      %c0_9 = arith.constant 0 : index
      %c0_10 = arith.constant 0 : index
      %11 = vector.load %arg8[%c0_9, %c0_10] : memref<2x1024xf32, #tpu.memory_space<vmem>>, vector<2x1024xf32>
      %cst_11 = arith.constant 1.250000e-01 : f32
      %12 = vector.broadcast %cst_11 : f32 to vector<2x1024xf32>
      %13 = arith.mulf %11, %12 : vector<2x1024xf32>
      %c0_12 = arith.constant 0 : index
      %c0_13 = arith.constant 0 : index
      %14 = vector.load %arg3[%c0_12, %c0_13] : memref<1024x256xf32, #tpu.memory_space<vmem>>, vector<1024x256xf32>
      %cst_14 = arith.constant dense<0.000000e+00> : vector<2x256xf32>
      %15 = tpu.matmul %13, %14, %cst_14 {dimension_numbers = #tpu.dot_dimension_numbers<[1], [0], [0], [1], [0, 0, 1, 1], [], []>} : vector<2x1024xf32>, vector<1024x256xf32>, vector<2x256xf32> -> vector<2x256xf32>
      %c0_15 = arith.constant 0 : index
      %c0_16 = arith.constant 0 : index
      %16 = vector.load %arg4[%c0_15, %c0_16] : memref<1x256xf32, #tpu.memory_space<vmem>>, vector<1x256xf32>
      %17 = vector.broadcast %16 : vector<1x256xf32> to vector<2x256xf32>
      %18 = arith.addf %15, %17 : vector<2x256xf32>
      %19 = math.tanh %18 : vector<2x256xf32>
      %c0_17 = arith.constant 0 : index
      %c0_18 = arith.constant 0 : index
      %20 = vector.load %arg5[%c0_17, %c0_18] : memref<256x128xf32, #tpu.memory_space<vmem>>, vector<256x128xf32>
      %cst_19 = arith.constant dense<0.000000e+00> : vector<2x128xf32>
      %21 = tpu.matmul %19, %20, %cst_19 {dimension_numbers = #tpu.dot_dimension_numbers<[1], [0], [0], [1], [0, 0, 1, 1], [], []>} : vector<2x256xf32>, vector<256x128xf32>, vector<2x128xf32> -> vector<2x128xf32>
      %c0_20 = arith.constant 0 : index
      %c0_21 = arith.constant 0 : index
      %22 = vector.load %arg6[%c0_20, %c0_21] : memref<1x128xf32, #tpu.memory_space<vmem>>, vector<1x128xf32>
      %23 = vector.broadcast %22 : vector<1x128xf32> to vector<2x128xf32>
      %24 = arith.addf %21, %23 : vector<2x128xf32>
      %25 = tpu.iota {dimensions = array<i32: 1>} : vector<2x128xi32>
      %c2_i32 = arith.constant 2 : i32
      %26 = vector.broadcast %c2_i32 : i32 to vector<2x128xi32>
      %27 = arith.cmpi slt, %25, %26 : vector<2x128xi32>
      %cst_22 = arith.constant 0xFF800000 : f32
      %28 = vector.broadcast %cst_22 : f32 to vector<2x128xf32>
      %29 = arith.select %27, %24, %28 : vector<2x128xi1>, vector<2x128xf32>
      %cst_23 = arith.constant dense<0xFF800000> : vector<2xf32>
      %30 = vector.multi_reduction <maximumf>, %29, %cst_23 [1] : vector<2x128xf32> to vector<2xf32>
      %31 = vector.shape_cast %30 : vector<2xf32> to vector<2x1xf32>
      %32 = vector.broadcast %31 : vector<2x1xf32> to vector<2x128xf32>
      %33 = arith.subf %29, %32 : vector<2x128xf32>
      %34 = math.exp %33 : vector<2x128xf32>
      %cst_24 = arith.constant dense<0.000000e+00> : vector<2xf32>
      %35 = vector.multi_reduction <add>, %34, %cst_24 [1] : vector<2x128xf32> to vector<2xf32>
      %36 = vector.shape_cast %35 : vector<2xf32> to vector<2x1xf32>
      %37 = math.log %36 : vector<2x1xf32>
      %38 = vector.broadcast %37 : vector<2x1xf32> to vector<2x128xf32>
      %39 = arith.subf %33, %38 : vector<2x128xf32>
      %c0_25 = arith.constant 0 : index
      %c0_26 = arith.constant 0 : index
      %40 = vector.load %arg7[%c0_25, %c0_26] : memref<2x128xf32, #tpu.memory_space<vmem>>, vector<2x128xf32>
      tpu.vector_store %arg7[%c0_25, %c0_26], %39 {strides = array<i32>} : memref<2x128xf32, #tpu.memory_space<vmem>>, vector<2x128xf32>,
    } else {
    }
    return
  }
  func.func @transform_0(%arg0: i32, %arg1: i32) -> (i32, i32, i32) {
    %c0_i32 = arith.constant 0 : i32
    %c0_i32_0 = arith.constant 0 : i32
    return %arg0, %arg1, %c0_i32 : i32, i32, i32
  }
  func.func @transform_1(%arg0: i32, %arg1: i32) -> (i32, i32) {
    %c0_i32 = arith.constant 0 : i32
    %c0_i32_0 = arith.constant 0 : i32
    %c0_i32_1 = arith.constant 0 : i32
    return %c0_i32, %c0_i32_0 : i32, i32
  }
  func.func @transform_2(%arg0: i32, %arg1: i32) -> (i32, i32) {
    %c0_i32 = arith.constant 0 : i32
    %c0_i32_0 = arith.constant 0 : i32
    %c0_i32_1 = arith.constant 0 : i32
    return %c0_i32, %c0_i32_0 : i32, i32
  }
  func.func @transform_3(%arg0: i32, %arg1: i32) -> (i32, i32) {
    %c0_i32 = arith.constant 0 : i32
    %c0_i32_0 = arith.constant 0 : i32
    %c0_i32_1 = arith.constant 0 : i32
    return %c0_i32, %c0_i32_0 : i32, i32
  }
  func.func @transform_4(%arg0: i32, %arg1: i32) -> (i32, i32) {
    %c0_i32 = arith.constant 0 : i32
    %c0_i32_0 = arith.constant 0 : i32
    %c0_i32_1 = arith.constant 0 : i32
    return %c0_i32, %c0_i32_0 : i32, i32
  }
  func.func @transform_5(%arg0: i32, %arg1: i32) -> (i32, i32) {
    %c0_i32 = arith.constant 0 : i32
    %c0_i32_0 = arith.constant 0 : i32
    return %arg0, %c0_i32 : i32, i32
  }
}

</mosaic_0001>

<llo_original>
// kernel: tpu_custom_call.1
$region0: #{tpu_custom_call.1}
  #allocation0 [shape = 'u32[]', space=smem, size = 0x4, offset = 0x4, fixed_abs, tag = 'smem constant byte address 0x4 - core index']
  #allocation1 [shape = 'u32[144,128]{1,0:T(1,128)}', space=vmem, size = 0x12000, scoped, tag = 'internal scratch']
  #allocation2 [shape = 'f32[2,1024]{1,0:T(2,128)}', space=vmem, size = 0x2000, scoped, tag = 'scratch operand']
  %s0 = inlined_call_operand.hbm [shape: f32[2,8,1024], index: 0, kind: input, shape index: {}]
  %s1 = inlined_call_operand.hbm [shape: f32[1024,256], index: 1, kind: input, shape index: {}]
  %s2 = inlined_call_operand.vmem [shape: f32[1,256], index: 2, kind: input, shape index: {}]
  %s3 = inlined_call_operand.hbm [shape: f32[256,128], index: 3, kind: input, shape index: {}]
  %s4 = inlined_call_operand.vmem [shape: f32[1,128], index: 4, kind: input, shape index: {}]
  %s5 = inlined_call_operand.hbm [shape: f32[2,128], index: 5, kind: output, shape index: {}]
  %s6 = sld [smem:[#allocation0]]
  $region50: #{tpu_custom_call.1} parent=0
    _
  %s8 = ssub.s32 1, %s6
  %s9 = scalar_select 0, %s8, %s6
  $region1: #{tpu_custom_call.1} parent=0
    #allocation3 [shape = 'u8[65536]{0}', space=vmem, size = 0x10000, scoped, tag = 'input window, operand 0, single buffered']
    #allocation4 [shape = 's32[1]{0}', space=sflag, size = 0x4, scoped, tag = 'scoped memory for tpu_custom_call.1']
    #allocation5 [shape = 's32[1]{0}', space=sflag, size = 0x4, scoped, tag = 'scoped memory for tpu_custom_call.1']
    #allocation6 [shape = 'u8[1048576]{0}', space=vmem, size = 0x100000, scoped, tag = 'input window, operand 1, single buffered']
    #allocation7 [shape = 's32[1]{0}', space=sflag, size = 0x4, scoped, tag = 'scoped memory for tpu_custom_call.1']
    #allocation8 [shape = 'u8[131072]{0}', space=vmem, size = 0x20000, scoped, tag = 'input window, operand 3, single buffered']
    #allocation9 [shape = 'u8[1024]{0}', space=vmem, size = 0x400, scoped, tag = 'output window, operand 0, single buffered']
    %10 = vsyncpa [#allocation4], 0
    %11 = vsyncpa [#allocation7], 0
    %12 = vsyncpa [#allocation5], 0
    // Predicated region
    $region2: #{tpu_custom_call.1} parent=1 // pred_check
      _
    $region3: #{tpu_custom_call.1} parent=1 // pred_check_branch
      %14 = sbr.rel (0) target = $region5
    $region4: #{tpu_custom_call.1} parent=1 // pred_region
      %s16 = ssub.s32 2048, 2048
      %17 = vsyncadd [#allocation4], %s16
      %s18 = sshll.u32 [#allocation3], 4
      %s19 = int_to_ptr.vmem [resolvable:$true] %s18
      %24 = dma.hbm_to_vmem [thread:$0]  %s0, 2048, %s19, [#allocation4], 1024, 1024, 64
    $region5: #{tpu_custom_call.1} parent=1 // pred_fallthru
      _
    // Predicated region
    $region6: #{tpu_custom_call.1} parent=1 // pred_check
      _
    $region7: #{tpu_custom_call.1} parent=1 // pred_check_branch
      %26 = sbr.rel (0) target = $region9
    $region8: #{tpu_custom_call.1} parent=1 // pred_region
      %s28 = ssub.s32 32768, 32768
      %29 = vsyncadd [#allocation7], %s28
      %s30 = sshll.u32 [#allocation6], 4
      %s31 = int_to_ptr.vmem [resolvable:$true] %s30
      %36 = dma.hbm_to_vmem [thread:$0]  %s1, 32768, %s31, [#allocation7], 256, 256, 16
    $region9: #{tpu_custom_call.1} parent=1 // pred_fallthru
      _
    // Predicated region
    $region10: #{tpu_custom_call.1} parent=1 // pred_check
      _
    $region11: #{tpu_custom_call.1} parent=1 // pred_check_branch
      %38 = sbr.rel (0) target = $region13
    $region12: #{tpu_custom_call.1} parent=1 // pred_region
      _
    $region13: #{tpu_custom_call.1} parent=1 // pred_fallthru
      _
    // Predicated region
    $region14: #{tpu_custom_call.1} parent=1 // pred_check
      _
    $region15: #{tpu_custom_call.1} parent=1 // pred_check_branch
      %40 = sbr.rel (0) target = $region17
    $region16: #{tpu_custom_call.1} parent=1 // pred_region
      %s42 = ssub.s32 4096, 4096
      %43 = vsyncadd [#allocation7], %s42
      %s44 = sshll.u32 [#allocation8], 4
      %s45 = int_to_ptr.vmem [resolvable:$true] %s44
      %50 = dma.hbm_to_vmem [thread:$0]  %s3, 4096, %s45, [#allocation7], 128, 128, 8
    $region17: #{tpu_custom_call.1} parent=1 // pred_fallthru
      _
    // Predicated region
    $region18: #{tpu_custom_call.1} parent=1 // pred_check
      _
    $region19: #{tpu_custom_call.1} parent=1 // pred_check_branch
      %52 = sbr.rel (0) target = $region21
    $region20: #{tpu_custom_call.1} parent=1 // pred_region
      _
    $region21: #{tpu_custom_call.1} parent=1 // pred_fallthru
      _
    // Predicated region
    $region22: #{tpu_custom_call.1} parent=1 // pred_check
      _
    $region23: #{tpu_custom_call.1} parent=1 // pred_check_branch
      %54 = sbr.rel (0) target = $region25
    $region24: #{tpu_custom_call.1} parent=1 // pred_region
      %55 = dma.done [#allocation4], 2048
    $region25: #{tpu_custom_call.1} parent=1 // pred_fallthru
      _
    // Predicated region
    $region26: #{tpu_custom_call.1} parent=1 // pred_check
      _
    $region27: #{tpu_custom_call.1} parent=1 // pred_check_branch
      %57 = sbr.rel (0) target = $region29
    $region28: #{tpu_custom_call.1} parent=1 // pred_region
      %58 = dma.done [#allocation7], 32768
    $region29: #{tpu_custom_call.1} parent=1 // pred_fallthru
      _
    // Predicated region
    $region30: #{tpu_custom_call.1} parent=1 // pred_check
      _
    $region31: #{tpu_custom_call.1} parent=1 // pred_check_branch
      %60 = sbr.rel (0) target = $region33
    $region32: #{tpu_custom_call.1} parent=1 // pred_region
      %61 = dma.done [#allocation7], 4096
    $region33: #{tpu_custom_call.1} parent=1 // pred_fallthru
      _
    %p62 = scmp.eq.s32.totalorder 0, 0
    // Predicated region
    $region34: #{tpu_custom_call.1} parent=1 // pred_check
      %p63 = pneg %p62
    $region35: #{tpu_custom_call.1} parent=1 // pred_check_branch
      %65 = sbr.rel (%p63) target = $region37
    $region36: #{tpu_custom_call.1} parent=1 // pred_region
      %66 = vst [vmem:[#allocation2] sm:$0xff] 0.0
      %67 = vst [vmem:[#allocation2 + $0x8] sm:$0xff] 0.0
    $region37: #{tpu_custom_call.1} parent=1 // pred_fallthru
      _
    %v68 = vld [vmem:[#allocation3] sm:$0xff]
    %v69 = vld [vmem:[#allocation3 + $0x8] sm:$0xff]
    %v70 = vld [vmem:[#allocation3 + $0x10] sm:$0xff]
    %v71 = vld [vmem:[#allocation3 + $0x18] sm:$0xff]
    %v72 = vld [vmem:[#allocation3 + $0x20] sm:$0xff]
    %v73 = vld [vmem:[#allocation3 + $0x28] sm:$0xff]
    %v74 = vld [vmem:[#allocation3 + $0x30] sm:$0xff]
    %v75 = vld [vmem:[#allocation3 + $0x38] sm:$0xff]
    %v76 = vld [vmem:[#allocation3 + $0x40] sm:$0xff]
    %v77 = vld [vmem:[#allocation3 + $0x48] sm:$0xff]
    %v78 = vld [vmem:[#allocation3 + $0x50] sm:$0xff]
    %v79 = vld [vmem:[#allocation3 + $0x58] sm:$0xff]
    %v80 = vld [vmem:[#allocation3 + $0x60] sm:$0xff]
    %v81 = vld [vmem:[#allocation3 + $0x68] sm:$0xff]
    %v82 = vld [vmem:[#allocation3 + $0x70] sm:$0xff]
    %v83 = vld [vmem:[#allocation3 + $0x78] sm:$0xff]
    %v84 = vld [vmem:[#allocation2] sm:$0xff]
    %v85 = vld [vmem:[#allocation2 + $0x8] sm:$0xff]
    %v86 = vrot.slane %v68, 4
    %v87 = vadd.f32 %v68, %v86
    %v88 = vrot.slane %v87, 2
    %v89 = vadd.f32 %v87, %v88
    %v90 = vrot.slane %v89, 1
    %v91 = vadd.f32 %v89, %v90
    %v92 = vrot.slane %v69, 4
    %v93 = vadd.f32 %v69, %v92
    %v94 = vrot.slane %v93, 2
    %v95 = vadd.f32 %v93, %v94
    %v96 = vrot.slane %v95, 1
    %v97 = vadd.f32 %v95, %v96
    %v98 = vrot.slane %v70, 4
    %v99 = vadd.f32 %v70, %v98
    %v100 = vrot.slane %v99, 2
    %v101 = vadd.f32 %v99, %v100
    %v102 = vrot.slane %v101, 1
    %v103 = vadd.f32 %v101, %v102
    %v104 = vrot.slane %v71, 4
    %v105 = vadd.f32 %v71, %v104
    %v106 = vrot.slane %v105, 2
    %v107 = vadd.f32 %v105, %v106
    %v108 = vrot.slane %v107, 1
    %v109 = vadd.f32 %v107, %v108
    %v110 = vrot.slane %v72, 4
    %v111 = vadd.f32 %v72, %v110
    %v112 = vrot.slane %v111, 2
    %v113 = vadd.f32 %v111, %v112
    %v114 = vrot.slane %v113, 1
    %v115 = vadd.f32 %v113, %v114
    %v116 = vrot.slane %v73, 4
    %v117 = vadd.f32 %v73, %v116
    %v118 = vrot.slane %v117, 2
    %v119 = vadd.f32 %v117, %v118
    %v120 = vrot.slane %v119, 1
    %v121 = vadd.f32 %v119, %v120
    %v122 = vrot.slane %v74, 4
    %v123 = vadd.f32 %v74, %v122
    %v124 = vrot.slane %v123, 2
    %v125 = vadd.f32 %v123, %v124
    %v126 = vrot.slane %v125, 1
    %v127 = vadd.f32 %v125, %v126
    %v128 = vrot.slane %v75, 4
    %v129 = vadd.f32 %v75, %v128
    %v130 = vrot.slane %v129, 2
    %v131 = vadd.f32 %v129, %v130
    %v132 = vrot.slane %v131, 1
    %v133 = vadd.f32 %v131, %v132
    %v134 = vrot.slane %v76, 4
    %v135 = vadd.f32 %v76, %v134
    %v136 = vrot.slane %v135, 2
    %v137 = vadd.f32 %v135, %v136
    %v138 = vrot.slane %v137, 1
    %v139 = vadd.f32 %v137, %v138
    %v140 = vrot.slane %v77, 4
    %v141 = vadd.f32 %v77, %v140
    %v142 = vrot.slane %v141, 2
    %v143 = vadd.f32 %v141, %v142
    %v144 = vrot.slane %v143, 1
    %v145 = vadd.f32 %v143, %v144
    %v146 = vrot.slane %v78, 4
    %v147 = vadd.f32 %v78, %v146
    %v148 = vrot.slane %v147, 2
    %v149 = vadd.f32 %v147, %v148
    %v150 = vrot.slane %v149, 1
    %v151 = vadd.f32 %v149, %v150
    %v152 = vrot.slane %v79, 4
    %v153 = vadd.f32 %v79, %v152
    %v154 = vrot.slane %v153, 2
    %v155 = vadd.f32 %v153, %v154
    %v156 = vrot.slane %v155, 1
    %v157 = vadd.f32 %v155, %v156
    %v158 = vrot.slane %v80, 4
    %v159 = vadd.f32 %v80, %v158
    %v160 = vrot.slane %v159, 2
    %v161 = vadd.f32 %v159, %v160
    %v162 = vrot.slane %v161, 1
    %v163 = vadd.f32 %v161, %v162
    %v164 = vrot.slane %v81, 4
    %v165 = vadd.f32 %v81, %v164
    %v166 = vrot.slane %v165, 2
    %v167 = vadd.f32 %v165, %v166
    %v168 = vrot.slane %v167, 1
    %v169 = vadd.f32 %v167, %v168
    %v170 = vrot.slane %v82, 4
    %v171 = vadd.f32 %v82, %v170
    %v172 = vrot.slane %v171, 2
    %v173 = vadd.f32 %v171, %v172
    %v174 = vrot.slane %v173, 1
    %v175 = vadd.f32 %v173, %v174
    %v176 = vrot.slane %v83, 4
    %v177 = vadd.f32 %v83, %v176
    %v178 = vrot.slane %v177, 2
    %v179 = vadd.f32 %v177, %v178
    %v180 = vrot.slane %v179, 1
    %v181 = vadd.f32 %v179, %v180
    %v198 = vcombine.low %v91, %v97
    %v199 = vcombine.low %v103, %v109
    %v201 = vunpack.c.l.s4 1983009808
    %v202 = vunpack.c.0.s8 %v201
    %v203 = vlaneseq
    %v204 = vshrl.u32 %v203, 7
    %v205 = vsub.s32 %v202, %v204
    %v206 = vrot.slane %v198, %v205
    %v208 = vunpack.c.l.s4 1983009808
    %v209 = vunpack.c.0.s8 %v208
    %v210 = vlaneseq
    %v211 = vshrl.u32 %v210, 7
    %v212 = vsub.s32 %v209, %v211
    %v213 = vrot.slane %v199, %v212
    %v214 = vcombine.low %v206, %v213
    %v215 = vcombine.low %v115, %v121
    %v216 = vcombine.low %v127, %v133
    %v218 = vunpack.c.l.s4 1983009808
    %v219 = vunpack.c.0.s8 %v218
    %v220 = vlaneseq
    %v221 = vshrl.u32 %v220, 7
    %v222 = vsub.s32 %v219, %v221
    %v223 = vrot.slane %v215, %v222
    %v225 = vunpack.c.l.s4 1983009808
    %v226 = vunpack.c.0.s8 %v225
    %v227 = vlaneseq
    %v228 = vshrl.u32 %v227, 7
    %v229 = vsub.s32 %v226, %v228
    %v230 = vrot.slane %v216, %v229
    %v231 = vcombine.low %v223, %v230
    %v232 = vcombine.low %v139, %v145
    %v233 = vcombine.low %v151, %v157
    %v235 = vunpack.c.l.s4 1983009808
    %v236 = vunpack.c.0.s8 %v235
    %v237 = vlaneseq
    %v238 = vshrl.u32 %v237, 7
    %v239 = vsub.s32 %v236, %v238
    %v240 = vrot.slane %v232, %v239
    %v242 = vunpack.c.l.s4 1983009808
    %v243 = vunpack.c.0.s8 %v242
    %v244 = vlaneseq
    %v245 = vshrl.u32 %v244, 7
    %v246 = vsub.s32 %v243, %v245
    %v247 = vrot.slane %v233, %v246
    %v248 = vcombine.low %v240, %v247
    %v249 = vcombine.low %v163, %v169
    %v250 = vcombine.low %v175, %v181
    %v252 = vunpack.c.l.s4 1983009808
    %v253 = vunpack.c.0.s8 %v252
    %v254 = vlaneseq
    %v255 = vshrl.u32 %v254, 7
    %v256 = vsub.s32 %v253, %v255
    %v257 = vrot.slane %v249, %v256
    %v259 = vunpack.c.l.s4 1983009808
    %v260 = vunpack.c.0.s8 %v259
    %v261 = vlaneseq
    %v262 = vshrl.u32 %v261, 7
    %v263 = vsub.s32 %v260, %v262
    %v264 = vrot.slane %v250, %v263
    %v265 = vcombine.low %v257, %v264
    %vm266 = vcmask 1044484
    %v267 = vsel %vm266, %v214, %v214
    %vm268 = vcmask 1046534
    %v269 = vsel %vm268, %v214, %v267
    %v270 = vrot.slane %v248, 7
    %vm271 = vcmask 1041409
    %v272 = vsel %vm271, %v270, %v269
    %vm273 = vcmask 1043459
    %v274 = vsel %vm273, %v270, %v272
    %vm275 = vcmask 1045509
    %v276 = vsel %vm275, %v270, %v274
    %vm277 = vcmask 1047559
    %v278 = vsel %vm277, %v270, %v276
    %v279 = vsel %vm266, %v231, %v231
    %v280 = vsel %vm268, %v231, %v279
    %v281 = vrot.slane %v265, 7
    %v282 = vsel %vm271, %v281, %v280
    %v283 = vsel %vm273, %v281, %v282
    %v284 = vsel %vm275, %v281, %v283
    %v285 = vsel %vm277, %v281, %v284
    %v288 = vadd.f32 %v84, %v278
    %v289 = vadd.f32 %v85, %v285
    %290 = vst [vmem:[#allocation2] sm:$0xff] %v288
    %291 = vst [vmem:[#allocation2 + $0x8] sm:$0xff] %v289
    // Predicated region
    $region38: #{tpu_custom_call.1} parent=1 // pred_check
      %p292 = pneg %p62
    $region39: #{tpu_custom_call.1} parent=1 // pred_check_branch
      %294 = sbr.rel (%p292) target = $region41
    $region40: #{tpu_custom_call.1} parent=1 // pred_region
      %v295 = vld [vmem:[#allocation2] sm:$0xff]
      %v296 = vld [vmem:[#allocation2 + $0x8] sm:$0xff]
      %v297 = vmul.f32 %v295, 0.125
      %v298 = vmul.f32 %v296, 0.125
      %v299 = vld [vmem:[#allocation6] sm:$0xff]
      %v300 = vld [vmem:[#allocation6 + $0x8] sm:$0xff]
      %v301 = vld [vmem:[#allocation6 + $0x10] sm:$0xff]
      %v302 = vld [vmem:[#allocation6 + $0x18] sm:$0xff]
      %v303 = vld [vmem:[#allocation6 + $0x20] sm:$0xff]
      %v304 = vld [vmem:[#allocation6 + $0x28] sm:$0xff]
      %v305 = vld [vmem:[#allocation6 + $0x30] sm:$0xff]
      %v306 = vld [vmem:[#allocation6 + $0x38] sm:$0xff]
      %v307 = vld [vmem:[#allocation6 + $0x40] sm:$0xff]
      %v308 = vld [vmem:[#allocation6 + $0x48] sm:$0xff]
      %v309 = vld [vmem:[#allocation6 + $0x50] sm:$0xff]
      %v310 = vld [vmem:[#allocation6 + $0x58] sm:$0xff]
      %v311 = vld [vmem:[#allocation6 + $0x60] sm:$0xff]
      %v312 = vld [vmem:[#allocation6 + $0x68] sm:$0xff]
      %v313 = vld [vmem:[#allocation6 + $0x70] sm:$0xff]
      %v314 = vld [vmem:[#allocation6 + $0x78] sm:$0xff]
      %v315 = vld [vmem:[#allocation6 + $0x80] sm:$0xff]
      %v316 = vld [vmem:[#allocation6 + $0x88] sm:$0xff]
      %v317 = vld [vmem:[#allocation6 + $0x90] sm:$0xff]
      %v318 = vld [vmem:[#allocation6 + $0x98] sm:$0xff]
      %v319 = vld [vmem:[#allocation6 + $0xa0] sm:$0xff]
      %v320 = vld [vmem:[#allocation6 + $0xa8] sm:$0xff]
      %v321 = vld [vmem:[#allocation6 + $0xb0] sm:$0xff]
      %v322 = vld [vmem:[#allocation6 + $0xb8] sm:$0xff]
      %v323 = vld [vmem:[#allocation6 + $0xc0] sm:$0xff]
      %v324 = vld [vmem:[#allocation6 + $0xc8] sm:$0xff]
      %v325 = vld [vmem:[#allocation6 + $0xd0] sm:$0xff]
      %v326 = vld [vmem:[#allocation6 + $0xd8] sm:$0xff]
      %v327 = vld [vmem:[#allocation6 + $0xe0] sm:$0xff]
      %v328 = vld [vmem:[#allocation6 + $0xe8] sm:$0xff]
      %v329 = vld [vmem:[#allocation6 + $0xf0] sm:$0xff]
      %v330 = vld [vmem:[#allocation6 + $0xf8] sm:$0xff]
      %v331 = vld [vmem:[#allocation6 + $0x100] sm:$0xff]
      %v332 = vld [vmem:[#allocation6 + $0x108] sm:$0xff]
      %v333 = vld [vmem:[#allocation6 + $0x110] sm:$0xff]
      %v334 = vld [vmem:[#allocation6 + $0x118] sm:$0xff]
      %v335 = vld [vmem:[#allocation6 + $0x120] sm:$0xff]
      %v336 = vld [vmem:[#allocation6 + $0x128] sm:$0xff]
      %v337 = vld [vmem:[#allocation6 + $0x130] sm:$0xff]
      %v338 = vld [vmem:[#allocation6 + $0x138] sm:$0xff]
      %v339 = vld [vmem:[#allocation6 + $0x140] sm:$0xff]
      %v340 = vld [vmem:[#allocation6 + $0x148] sm:$0xff]
      %v341 = vld [vmem:[#allocation6 + $0x150] sm:$0xff]
      %v342 = vld [vmem:[#allocation6 + $0x158] sm:$0xff]
      %v343 = vld [vmem:[#allocation6 + $0x160] sm:$0xff]
      %v344 = vld [vmem:[#allocation6 + $0x168] sm:$0xff]
      %v345 = vld [vmem:[#allocation6 + $0x170] sm:$0xff]
      %v346 = vld [vmem:[#allocation6 + $0x178] sm:$0xff]
      %v347 = vld [vmem:[#allocation6 + $0x180] sm:$0xff]
      %v348 = vld [vmem:[#allocation6 + $0x188] sm:$0xff]
      %v349 = vld [vmem:[#allocation6 + $0x190] sm:$0xff]
      %v350 = vld [vmem:[#allocation6 + $0x198] sm:$0xff]
      %v351 = vld [vmem:[#allocation6 + $0x1a0] sm:$0xff]
      %v352 = vld [vmem:[#allocation6 + $0x1a8] sm:$0xff]
      %v353 = vld [vmem:[#allocation6 + $0x1b0] sm:$0xff]
      %v354 = vld [vmem:[#allocation6 + $0x1b8] sm:$0xff]
      %v355 = vld [vmem:[#allocation6 + $0x1c0] sm:$0xff]
      %v356 = vld [vmem:[#allocation6 + $0x1c8] sm:$0xff]
      %v357 = vld [vmem:[#allocation6 + $0x1d0] sm:$0xff]
      %v358 = vld [vmem:[#allocation6 + $0x1d8] sm:$0xff]
      %v359 = vld [vmem:[#allocation6 + $0x1e0] sm:$0xff]
      %v360 = vld [vmem:[#allocation6 + $0x1e8] sm:$0xff]
      %v361 = vld [vmem:[#allocation6 + $0x1f0] sm:$0xff]
      %v362 = vld [vmem:[#allocation6 + $0x1f8] sm:$0xff]
      %v363 = vld [vmem:[#allocation6 + $0x200] sm:$0xff]
      %v364 = vld [vmem:[#allocation6 + $0x208] sm:$0xff]
      %v365 = vld [vmem:[#allocation6 + $0x210] sm:$0xff]
      %v366 = vld [vmem:[#allocation6 + $0x218] sm:$0xff]
      %v367 = vld [vmem:[#allocation6 + $0x220] sm:$0xff]
      %v368 = vld [vmem:[#allocation6 + $0x228] sm:$0xff]
      %v369 = vld [vmem:[#allocation6 + $0x230] sm:$0xff]
      %v370 = vld [vmem:[#allocation6 + $0x238] sm:$0xff]
      %v371 = vld [vmem:[#allocation6 + $0x240] sm:$0xff]
      %v372 = vld [vmem:[#allocation6 + $0x248] sm:$0xff]
      %v373 = vld [vmem:[#allocation6 + $0x250] sm:$0xff]
      %v374 = vld [vmem:[#allocation6 + $0x258] sm:$0xff]
      %v375 = vld [vmem:[#allocation6 + $0x260] sm:$0xff]
      %v376 = vld [vmem:[#allocation6 + $0x268] sm:$0xff]
      %v377 = vld [vmem:[#allocation6 + $0x270] sm:$0xff]
      %v378 = vld [vmem:[#allocation6 + $0x278] sm:$0xff]
      %v379 = vld [vmem:[#allocation6 + $0x280] sm:$0xff]
      %v380 = vld [vmem:[#allocation6 + $0x288] sm:$0xff]
      %v381 = vld [vmem:[#allocation6 + $0x290] sm:$0xff]
      %v382 = vld [vmem:[#allocation6 + $0x298] sm:$0xff]
      %v383 = vld [vmem:[#allocation6 + $0x2a0] sm:$0xff]
      %v384 = vld [vmem:[#allocation6 + $0x2a8] sm:$0xff]
      %v385 = vld [vmem:[#allocation6 + $0x2b0] sm:$0xff]
      %v386 = vld [vmem:[#allocation6 + $0x2b8] sm:$0xff]
      %v387 = vld [vmem:[#allocation6 + $0x2c0] sm:$0xff]
      %v388 = vld [vmem:[#allocation6 + $0x2c8] sm:$0xff]
      %v389 = vld [vmem:[#allocation6 + $0x2d0] sm:$0xff]
      %v390 = vld [vmem:[#allocation6 + $0x2d8] sm:$0xff]
      %v391 = vld [vmem:[#allocation6 + $0x2e0] sm:$0xff]
      %v392 = vld [vmem:[#allocation6 + $0x2e8] sm:$0xff]
      %v393 = vld [vmem:[#allocation6 + $0x2f0] sm:$0xff]
      %v394 = vld [vmem:[#allocation6 + $0x2f8] sm:$0xff]
      %v395 = vld [vmem:[#allocation6 + $0x300] sm:$0xff]
      %v396 = vld [vmem:[#allocation6 + $0x308] sm:$0xff]
      %v397 = vld [vmem:[#allocation6 + $0x310] sm:$0xff]
      %v398 = vld [vmem:[#allocation6 + $0x318] sm:$0xff]
      %v399 = vld [vmem:[#allocation6 + $0x320] sm:$0xff]
      %v400 = vld [vmem:[#allocation6 + $0x328] sm:$0xff]
      %v401 = vld [vmem:[#allocation6 + $0x330] sm:$0xff]
      %v402 = vld [vmem:[#allocation6 + $0x338] sm:$0xff]
      %v403 = vld [vmem:[#allocation6 + $0x340] sm:$0xff]
      %v404 = vld [vmem:[#allocation6 + $0x348] sm:$0xff]
      %v405 = vld [vmem:[#allocation6 + $0x350] sm:$0xff]
      %v406 = vld [vmem:[#allocation6 + $0x358] sm:$0xff]
      %v407 = vld [vmem:[#allocation6 + $0x360] sm:$0xff]
      %v408 = vld [vmem:[#allocation6 + $0x368] sm:$0xff]
      %v409 = vld [vmem:[#allocation6 + $0x370] sm:$0xff]
      %v410 = vld [vmem:[#allocation6 + $0x378] sm:$0xff]
      %v411 = vld [vmem:[#allocation6 + $0x380] sm:$0xff]
      %v412 = vld [vmem:[#allocation6 + $0x388] sm:$0xff]
      %v413 = vld [vmem:[#allocation6 + $0x390] sm:$0xff]
      %v414 = vld [vmem:[#allocation6 + $0x398] sm:$0xff]
      %v415 = vld [vmem:[#allocation6 + $0x3a0] sm:$0xff]
      %v416 = vld [vmem:[#allocation6 + $0x3a8] sm:$0xff]
      %v417 = vld [vmem:[#allocation6 + $0x3b0] sm:$0xff]
      %v418 = vld [vmem:[#allocation6 + $0x3b8] sm:$0xff]
      %v419 = vld [vmem:[#allocation6 + $0x3c0] sm:$0xff]
      %v420 = vld [vmem:[#allocation6 + $0x3c8] sm:$0xff]
      %v421 = vld [vmem:[#allocation6 + $0x3d0] sm:$0xff]
      %v422 = vld [vmem:[#allocation6 + $0x3d8] sm:$0xff]
      %v423 = vld [vmem:[#allocation6 + $0x3e0] sm:$0xff]
      %v424 = vld [vmem:[#allocation6 + $0x3e8] sm:$0xff]
      %v425 = vld [vmem:[#allocation6 + $0x3f0] sm:$0xff]
      %v426 = vld [vmem:[#allocation6 + $0x3f8] sm:$0xff]
      %v427 = vld [vmem:[#allocation6 + $0x400] sm:$0xff]
      %v428 = vld [vmem:[#allocation6 + $0x408] sm:$0xff]
      %v429 = vld [vmem:[#allocation6 + $0x410] sm:$0xff]
      %v430 = vld [vmem:[#allocation6 + $0x418] sm:$0xff]
      %v431 = vld [vmem:[#allocation6 + $0x420] sm:$0xff]
      %v432 = vld [vmem:[#allocation6 + $0x428] sm:$0xff]
      %v433 = vld [vmem:[#allocation6 + $0x430] sm:$0xff]
      %v434 = vld [vmem:[#allocation6 + $0x438] sm:$0xff]
      %v435 = vld [vmem:[#allocation6 + $0x440] sm:$0xff]
      %v436 = vld [vmem:[#allocation6 + $0x448] sm:$0xff]
      %v437 = vld [vmem:[#allocation6 + $0x450] sm:$0xff]
      %v438 = vld [vmem:[#allocation6 + $0x458] sm:$0xff]
      %v439 = vld [vmem:[#allocation6 + $0x460] sm:$0xff]
      %v440 = vld [vmem:[#allocation6 + $0x468] sm:$0xff]
      %v441 = vld [vmem:[#allocation6 + $0x470] sm:$0xff]
      %v442 = vld [vmem:[#allocation6 + $0x478] sm:$0xff]
      %v443 = vld [vmem:[#allocation6 + $0x480] sm:$0xff]
      %v444 = vld [vmem:[#allocation6 + $0x488] sm:$0xff]
      %v445 = vld [vmem:[#allocation6 + $0x490] sm:$0xff]
      %v446 = vld [vmem:[#allocation6 + $0x498] sm:$0xff]
      %v447 = vld [vmem:[#allocation6 + $0x4a0] sm:$0xff]
      %v448 = vld [vmem:[#allocation6 + $0x4a8] sm:$0xff]
      %v449 = vld [vmem:[#allocation6 + $0x4b0] sm:$0xff]
      %v450 = vld [vmem:[#allocation6 + $0x4b8] sm:$0xff]
      %v451 = vld [vmem:[#allocation6 + $0x4c0] sm:$0xff]
      %v452 = vld [vmem:[#allocation6 + $0x4c8] sm:$0xff]
      %v453 = vld [vmem:[#allocation6 + $0x4d0] sm:$0xff]
      %v454 = vld [vmem:[#allocation6 + $0x4d8] sm:$0xff]
      %v455 = vld [vmem:[#allocation6 + $0x4e0] sm:$0xff]
      %v456 = vld [vmem:[#allocation6 + $0x4e8] sm:$0xff]
      %v457 = vld [vmem:[#allocation6 + $0x4f0] sm:$0xff]
      %v458 = vld [vmem:[#allocation6 + $0x4f8] sm:$0xff]
      %v459 = vld [vmem:[#allocation6 + $0x500] sm:$0xff]
      %v460 = vld [vmem:[#allocation6 + $0x508] sm:$0xff]
      %v461 = vld [vmem:[#allocation6 + $0x510] sm:$0xff]
      %v462 = vld [vmem:[#allocation6 + $0x518] sm:$0xff]
      %v463 = vld [vmem:[#allocation6 + $0x520] sm:$0xff]
      %v464 = vld [vmem:[#allocation6 + $0x528] sm:$0xff]
      %v465 = vld [vmem:[#allocation6 + $0x530] sm:$0xff]
      %v466 = vld [vmem:[#allocation6 + $0x538] sm:$0xff]
      %v467 = vld [vmem:[#allocation6 + $0x540] sm:$0xff]
      %v468 = vld [vmem:[#allocation6 + $0x548] sm:$0xff]
      %v469 = vld [vmem:[#allocation6 + $0x550] sm:$0xff]
      %v470 = vld [vmem:[#allocation6 + $0x558] sm:$0xff]
      %v471 = vld [vmem:[#allocation6 + $0x560] sm:$0xff]
      %v472 = vld [vmem:[#allocation6 + $0x568] sm:$0xff]
      %v473 = vld [vmem:[#allocation6 + $0x570] sm:$0xff]
      %v474 = vld [vmem:[#allocation6 + $0x578] sm:$0xff]
      %v475 = vld [vmem:[#allocation6 + $0x580] sm:$0xff]
      %v476 = vld [vmem:[#allocation6 + $0x588] sm:$0xff]
      %v477 = vld [vmem:[#allocation6 + $0x590] sm:$0xff]
      %v478 = vld [vmem:[#allocation6 + $0x598] sm:$0xff]
      %v479 = vld [vmem:[#allocation6 + $0x5a0] sm:$0xff]
      %v480 = vld [vmem:[#allocation6 + $0x5a8] sm:$0xff]
      %v481 = vld [vmem:[#allocation6 + $0x5b0] sm:$0xff]
      %v482 = vld [vmem:[#allocation6 + $0x5b8] sm:$0xff]
      %v483 = vld [vmem:[#allocation6 + $0x5c0] sm:$0xff]
      %v484 = vld [vmem:[#allocation6 + $0x5c8] sm:$0xff]
      %v485 = vld [vmem:[#allocation6 + $0x5d0] sm:$0xff]
      %v486 = vld [vmem:[#allocation6 + $0x5d8] sm:$0xff]
      %v487 = vld [vmem:[#allocation6 + $0x5e0] sm:$0xff]
      %v488 = vld [vmem:[#allocation6 + $0x5e8] sm:$0xff]
      %v489 = vld [vmem:[#allocation6 + $0x5f0] sm:$0xff]
      %v490 = vld [vmem:[#allocation6 + $0x5f8] sm:$0xff]
      %v491 = vld [vmem:[#allocation6 + $0x600] sm:$0xff]
      %v492 = vld [vmem:[#allocation6 + $0x608] sm:$0xff]
      %v493 = vld [vmem:[#allocation6 + $0x610] sm:$0xff]
      %v494 = vld [vmem:[#allocation6 + $0x618] sm:$0xff]
      %v495 = vld [vmem:[#allocation6 + $0x620] sm:$0xff]
      %v496 = vld [vmem:[#allocation6 + $0x628] sm:$0xff]
      %v497 = vld [vmem:[#allocation6 + $0x630] sm:$0xff]
      %v498 = vld [vmem:[#allocation6 + $0x638] sm:$0xff]
      %v499 = vld [vmem:[#allocation6 + $0x640] sm:$0xff]
      %v500 = vld [vmem:[#allocation6 + $0x648] sm:$0xff]
      %v501 = vld [vmem:[#allocation6 + $0x650] sm:$0xff]
      %v502 = vld [vmem:[#allocation6 + $0x658] sm:$0xff]
      %v503 = vld [vmem:[#allocation6 + $0x660] sm:$0xff]
      %v504 = vld [vmem:[#allocation6 + $0x668] sm:$0xff]
      %v505 = vld [vmem:[#allocation6 + $0x670] sm:$0xff]
      %v506 = vld [vmem:[#allocation6 + $0x678] sm:$0xff]
      %v507 = vld [vmem:[#allocation6 + $0x680] sm:$0xff]
      %v508 = vld [vmem:[#allocation6 + $0x688] sm:$0xff]
      %v509 = vld [vmem:[#allocation6 + $0x690] sm:$0xff]
      %v510 = vld [vmem:[#allocation6 + $0x698] sm:$0xff]
      %v511 = vld [vmem:[#allocation6 + $0x6a0] sm:$0xff]
      %v512 = vld [vmem:[#allocation6 + $0x6a8] sm:$0xff]
      %v513 = vld [vmem:[#allocation6 + $0x6b0] sm:$0xff]
      %v514 = vld [vmem:[#allocation6 + $0x6b8] sm:$0xff]
      %v515 = vld [vmem:[#allocation6 + $0x6c0] sm:$0xff]
      %v516 = vld [vmem:[#allocation6 + $0x6c8] sm:$0xff]
      %v517 = vld [vmem:[#allocation6 + $0x6d0] sm:$0xff]
      %v518 = vld [vmem:[#allocation6 + $0x6d8] sm:$0xff]
      %v519 = vld [vmem:[#allocation6 + $0x6e0] sm:$0xff]
      %v520 = vld [vmem:[#allocation6 + $0x6e8] sm:$0xff]
      %v521 = vld [vmem:[#allocation6 + $0x6f0] sm:$0xff]
      %v522 = vld [vmem:[#allocation6 + $0x6f8] sm:$0xff]
      %v523 = vld [vmem:[#allocation6 + $0x700] sm:$0xff]
      %v524 = vld [vmem:[#allocation6 + $0x708] sm:$0xff]
      %v525 = vld [vmem:[#allocation6 + $0x710] sm:$0xff]
      %v526 = vld [vmem:[#allocation6 + $0x718] sm:$0xff]
      %v527 = vld [vmem:[#allocation6 + $0x720] sm:$0xff]
      %v528 = vld [vmem:[#allocation6 + $0x728] sm:$0xff]
      %v529 = vld [vmem:[#allocation6 + $0x730] sm:$0xff]
      %v530 = vld [vmem:[#allocation6 + $0x738] sm:$0xff]
      %v531 = vld [vmem:[#allocation6 + $0x740] sm:$0xff]
      %v532 = vld [vmem:[#allocation6 + $0x748] sm:$0xff]
      %v533 = vld [vmem:[#allocation6 + $0x750] sm:$0xff]
      %v534 = vld [vmem:[#allocation6 + $0x758] sm:$0xff]
      %v535 = vld [vmem:[#allocation6 + $0x760] sm:$0xff]
      %v536 = vld [vmem:[#allocation6 + $0x768] sm:$0xff]
      %v537 = vld [vmem:[#allocation6 + $0x770] sm:$0xff]
      %v538 = vld [vmem:[#allocation6 + $0x778] sm:$0xff]
      %v539 = vld [vmem:[#allocation6 + $0x780] sm:$0xff]
      %v540 = vld [vmem:[#allocation6 + $0x788] sm:$0xff]
      %v541 = vld [vmem:[#allocation6 + $0x790] sm:$0xff]
      %v542 = vld [vmem:[#allocation6 + $0x798] sm:$0xff]
      %v543 = vld [vmem:[#allocation6 + $0x7a0] sm:$0xff]
      %v544 = vld [vmem:[#allocation6 + $0x7a8] sm:$0xff]
      %v545 = vld [vmem:[#allocation6 + $0x7b0] sm:$0xff]
      %v546 = vld [vmem:[#allocation6 + $0x7b8] sm:$0xff]
      %v547 = vld [vmem:[#allocation6 + $0x7c0] sm:$0xff]
      %v548 = vld [vmem:[#allocation6 + $0x7c8] sm:$0xff]
      %v549 = vld [vmem:[#allocation6 + $0x7d0] sm:$0xff]
      %v550 = vld [vmem:[#allocation6 + $0x7d8] sm:$0xff]
      %v551 = vld [vmem:[#allocation6 + $0x7e0] sm:$0xff]
      %v552 = vld [vmem:[#allocation6 + $0x7e8] sm:$0xff]
      %v553 = vld [vmem:[#allocation6 + $0x7f0] sm:$0xff]
      %v554 = vld [vmem:[#allocation6 + $0x7f8] sm:$0xff]
      %v555 = vld [vmem:[%s2] sm:$0x3]
      %v557 = vlaneseq
      %v558 = vshrl.u32 %v557, 7
      %v559 = vsub.s32 0, %v558
      %v560 = vrot.slane %v555, %v559
      %v561 = vlaneseq
      %v562 = vshrl.u32 %v561, 7
      %v563 = vsub.s32 1, %v562
      %v564 = vrot.slane %v555, %v563
      %v569 = vcombine.high %v297, %v297
      %v571 = vunpack.c.l.s4 1983009808
      %v572 = vunpack.c.0.s8 %v571
      %v573 = vlaneseq
      %v574 = vshrl.u32 %v573, 7
      %v575 = vsub.s32 %v572, %v574
      %v576 = vrot.slane %v297, %v575
      %v578 = vunpack.c.l.s4 1983009808
      %v579 = vunpack.c.0.s8 %v578
      %v580 = vlaneseq
      %v581 = vshrl.u32 %v580, 7
      %v582 = vsub.s32 %v579, %v581
      %v583 = vrot.slane %v569, %v582
      %v584 = vcombine.high %v576, %v576
      %v585 = vcombine.high %v583, %v583
      %v586 = vcombine.high %v298, %v298
      %v588 = vunpack.c.l.s4 1983009808
      %v589 = vunpack.c.0.s8 %v588
      %v590 = vlaneseq
      %v591 = vshrl.u32 %v590, 7
      %v592 = vsub.s32 %v589, %v591
      %v593 = vrot.slane %v298, %v592
      %v595 = vunpack.c.l.s4 1983009808
      %v596 = vunpack.c.0.s8 %v595
      %v597 = vlaneseq
      %v598 = vshrl.u32 %v597, 7
      %v599 = vsub.s32 %v596, %v598
      %v600 = vrot.slane %v586, %v599
      %v601 = vcombine.high %v593, %v593
      %v602 = vcombine.high %v600, %v600
      %611 = vmatprep.subr.mxu0 %v300
      %612 = vmatpush1.msra.mxu0 %v299
      %613 = vmatprep.subr.mxu0 %v302
      %614 = vmatpush1.msra.mxu0 %v301
      %615 = vmatprep.subr.mxu0 %v304
      %616 = vmatpush1.msra.mxu0 %v303
      %617 = vmatprep.subr.mxu0 %v306
      %618 = vmatpush1.msra.mxu0 %v305
      %619 = vmatprep.subr.mxu0 %v308
      %620 = vmatpush1.msra.mxu0 %v307
      %621 = vmatprep.subr.mxu0 %v310
      %622 = vmatpush1.msra.mxu0 %v309
      %623 = vmatprep.subr.mxu0 %v312
      %624 = vmatpush1.msra.mxu0 %v311
      %625 = vmatprep.subr.mxu0 %v314
      %626 = vmatpush1.msra.mxu0 %v313
      %627 = vmatprep.subr.mxu0 %v316
      %628 = vmatpush1.msra.mxu0 %v315
      %629 = vmatprep.subr.mxu0 %v318
      %630 = vmatpush1.msra.mxu0 %v317
      %631 = vmatprep.subr.mxu0 %v320
      %632 = vmatpush1.msra.mxu0 %v319
      %633 = vmatprep.subr.mxu0 %v322
      %634 = vmatpush1.msra.mxu0 %v321
      %635 = vmatprep.subr.mxu0 %v324
      %636 = vmatpush1.msra.mxu0 %v323
      %637 = vmatprep.subr.mxu0 %v326
      %638 = vmatpush1.msra.mxu0 %v325
      %639 = vmatprep.subr.mxu0 %v328
      %640 = vmatpush1.msra.mxu0 %v327
      %641 = vmatprep.subr.mxu0 %v330
      %642 = vmatpush1.msra.mxu0 %v329
      %643 = vmatprep.subr.mxu0 %v332
      %644 = vmatpush1.msra.mxu0 %v331
      %645 = vmatprep.subr.mxu0 %v334
      %646 = vmatpush1.msra.mxu0 %v333
      %647 = vmatprep.subr.mxu0 %v336
      %648 = vmatpush1.msra.mxu0 %v335
      %649 = vmatprep.subr.mxu0 %v338
      %650 = vmatpush1.msra.mxu0 %v337
      %651 = vmatprep.subr.mxu0 %v340
      %652 = vmatpush1.msra.mxu0 %v339
      %653 = vmatprep.subr.mxu0 %v342
      %654 = vmatpush1.msra.mxu0 %v341
      %655 = vmatprep.subr.mxu0 %v344
      %656 = vmatpush1.msra.mxu0 %v343
      %657 = vmatprep.subr.mxu0 %v346
      %658 = vmatpush1.msra.mxu0 %v345
      %659 = vmatprep.subr.mxu0 %v348
      %660 = vmatpush1.msra.mxu0 %v347
      %661 = vmatprep.subr.mxu0 %v350
      %662 = vmatpush1.msra.mxu0 %v349
      %663 = vmatprep.subr.mxu0 %v352
      %664 = vmatpush1.msra.mxu0 %v351
      %665 = vmatprep.subr.mxu0 %v354
      %666 = vmatpush1.msra.mxu0 %v353
      %667 = vmatprep.subr.mxu0 %v356
      %668 = vmatpush1.msra.mxu0 %v355
      %669 = vmatprep.subr.mxu0 %v358
      %670 = vmatpush1.msra.mxu0 %v357
      %671 = vmatprep.subr.mxu0 %v360
      %672 = vmatpush1.msra.mxu0 %v359
      %673 = vmatprep.subr.mxu0 %v362
      %674 = vmatpush1.msra.mxu0 %v361
      %675 = vmatprep.mubr.f32.mxu0 %v584
      %676 = vmatmul.mubr.f32.gmra.mrb[0].mxu0 %v576
      %v677 = vpop.f32.mrb[0].mxu0
      %v678 = vadd.f32 %v560, %v677
      %v679 = vpop.f32.mrb[0].mxu0
      %v680 = vadd.f32 %v564, %v679
      %681 = vdwg.mxu0
      %682 = vmatprep.subr.mxu0 %v364
      %683 = vmatpush1.msra.mxu0 %v363
      %684 = vmatprep.subr.mxu0 %v366
      %685 = vmatpush1.msra.mxu0 %v365
      %686 = vmatprep.subr.mxu0 %v368
      %687 = vmatpush1.msra.mxu0 %v367
      %688 = vmatprep.subr.mxu0 %v370
      %689 = vmatpush1.msra.mxu0 %v369
      %690 = vmatprep.subr.mxu0 %v372
      %691 = vmatpush1.msra.mxu0 %v371
      %692 = vmatprep.subr.mxu0 %v374
      %693 = vmatpush1.msra.mxu0 %v373
      %694 = vmatprep.subr.mxu0 %v376
      %695 = vmatpush1.msra.mxu0 %v375
      %696 = vmatprep.subr.mxu0 %v378
      %697 = vmatpush1.msra.mxu0 %v377
      %698 = vmatprep.subr.mxu0 %v380
      %699 = vmatpush1.msra.mxu0 %v379
      %700 = vmatprep.subr.mxu0 %v382
      %701 = vmatpush1.msra.mxu0 %v381
      %702 = vmatprep.subr.mxu0 %v384
      %703 = vmatpush1.msra.mxu0 %v383
      %704 = vmatprep.subr.mxu0 %v386
      %705 = vmatpush1.msra.mxu0 %v385
      %706 = vmatprep.subr.mxu0 %v388
      %707 = vmatpush1.msra.mxu0 %v387
      %708 = vmatprep.subr.mxu0 %v390
      %709 = vmatpush1.msra.mxu0 %v389
      %710 = vmatprep.subr.mxu0 %v392
      %711 = vmatpush1.msra.mxu0 %v391
      %712 = vmatprep.subr.mxu0 %v394
      %713 = vmatpush1.msra.mxu0 %v393
      %714 = vmatprep.subr.mxu0 %v396
      %715 = vmatpush1.msra.mxu0 %v395
      %716 = vmatprep.subr.mxu0 %v398
      %717 = vmatpush1.msra.mxu0 %v397
      %718 = vmatprep.subr.mxu0 %v400
      %719 = vmatpush1.msra.mxu0 %v399
      %720 = vmatprep.subr.mxu0 %v402
      %721 = vmatpush1.msra.mxu0 %v401
      %722 = vmatprep.subr.mxu0 %v404
      %723 = vmatpush1.msra.mxu0 %v403
      %724 = vmatprep.subr.mxu0 %v406
      %725 = vmatpush1.msra.mxu0 %v405
      %726 = vmatprep.subr.mxu0 %v408
      %727 = vmatpush1.msra.mxu0 %v407
      %728 = vmatprep.subr.mxu0 %v410
      %729 = vmatpush1.msra.mxu0 %v409
      %730 = vmatprep.subr.mxu0 %v412
      %731 = vmatpush1.msra.mxu0 %v411
      %732 = vmatprep.subr.mxu0 %v414
      %733 = vmatpush1.msra.mxu0 %v413
      %734 = vmatprep.subr.mxu0 %v416
      %735 = vmatpush1.msra.mxu0 %v415
      %736 = vmatprep.subr.mxu0 %v418
      %737 = vmatpush1.msra.mxu0 %v417
      %738 = vmatprep.subr.mxu0 %v420
      %739 = vmatpush1.msra.mxu0 %v419
      %740 = vmatprep.subr.mxu0 %v422
      %741 = vmatpush1.msra.mxu0 %v421
      %742 = vmatprep.subr.mxu0 %v424
      %743 = vmatpush1.msra.mxu0 %v423
      %744 = vmatprep.subr.mxu0 %v426
      %745 = vmatpush1.msra.mxu0 %v425
      %746 = vmatprep.mubr.f32.mxu0 %v585
      %747 = vmatmul.mubr.f32.gmra.mrb[0].mxu0 %v583
      %v748 = vpop.f32.mrb[0].mxu0
      %v749 = vadd.f32 %v678, %v748
      %v750 = vpop.f32.mrb[0].mxu0
      %v751 = vadd.f32 %v680, %v750
      %752 = vdwg.mxu0
      %753 = vmatprep.subr.mxu0 %v428
      %754 = vmatpush1.msra.mxu0 %v427
      %755 = vmatprep.subr.mxu0 %v430
      %756 = vmatpush1.msra.mxu0 %v429
      %757 = vmatprep.subr.mxu0 %v432
      %758 = vmatpush1.msra.mxu0 %v431
      %759 = vmatprep.subr.mxu0 %v434
      %760 = vmatpush1.msra.mxu0 %v433
      %761 = vmatprep.subr.mxu0 %v436
      %762 = vmatpush1.msra.mxu0 %v435
      %763 = vmatprep.subr.mxu0 %v438
      %764 = vmatpush1.msra.mxu0 %v437
      %765 = vmatprep.subr.mxu0 %v440
      %766 = vmatpush1.msra.mxu0 %v439
      %767 = vmatprep.subr.mxu0 %v442
      %768 = vmatpush1.msra.mxu0 %v441
      %769 = vmatprep.subr.mxu0 %v444
      %770 = vmatpush1.msra.mxu0 %v443
      %771 = vmatprep.subr.mxu0 %v446
      %772 = vmatpush1.msra.mxu0 %v445
      %773 = vmatprep.subr.mxu0 %v448
      %774 = vmatpush1.msra.mxu0 %v447
      %775 = vmatprep.subr.mxu0 %v450
      %776 = vmatpush1.msra.mxu0 %v449
      %777 = vmatprep.subr.mxu0 %v452
      %778 = vmatpush1.msra.mxu0 %v451
      %779 = vmatprep.subr.mxu0 %v454
      %780 = vmatpush1.msra.mxu0 %v453
      %781 = vmatprep.subr.mxu0 %v456
      %782 = vmatpush1.msra.mxu0 %v455
      %783 = vmatprep.subr.mxu0 %v458
      %784 = vmatpush1.msra.mxu0 %v457
      %785 = vmatprep.subr.mxu0 %v460
      %786 = vmatpush1.msra.mxu0 %v459
      %787 = vmatprep.subr.mxu0 %v462
      %788 = vmatpush1.msra.mxu0 %v461
      %789 = vmatprep.subr.mxu0 %v464
      %790 = vmatpush1.msra.mxu0 %v463
      %791 = vmatprep.subr.mxu0 %v466
      %792 = vmatpush1.msra.mxu0 %v465
      %793 = vmatprep.subr.mxu0 %v468
      %794 = vmatpush1.msra.mxu0 %v467
      %795 = vmatprep.subr.mxu0 %v470
      %796 = vmatpush1.msra.mxu0 %v469
      %797 = vmatprep.subr.mxu0 %v472
      %798 = vmatpush1.msra.mxu0 %v471
      %799 = vmatprep.subr.mxu0 %v474
      %800 = vmatpush1.msra.mxu0 %v473
      %801 = vmatprep.subr.mxu0 %v476
      %802 = vmatpush1.msra.mxu0 %v475
      %803 = vmatprep.subr.mxu0 %v478
      %804 = vmatpush1.msra.mxu0 %v477
      %805 = vmatprep.subr.mxu0 %v480
      %806 = vmatpush1.msra.mxu0 %v479
      %807 = vmatprep.subr.mxu0 %v482
      %808 = vmatpush1.msra.mxu0 %v481
      %809 = vmatprep.subr.mxu0 %v484
      %810 = vmatpush1.msra.mxu0 %v483
      %811 = vmatprep.subr.mxu0 %v486
      %812 = vmatpush1.msra.mxu0 %v485
      %813 = vmatprep.subr.mxu0 %v488
      %814 = vmatpush1.msra.mxu0 %v487
      %815 = vmatprep.subr.mxu0 %v490
      %816 = vmatpush1.msra.mxu0 %v489
      %817 = vmatprep.mubr.f32.mxu0 %v601
      %818 = vmatmul.mubr.f32.gmra.mrb[0].mxu0 %v593
      %v819 = vpop.f32.mrb[0].mxu0
      %v820 = vadd.f32 %v749, %v819
      %v821 = vpop.f32.mrb[0].mxu0
      %v822 = vadd.f32 %v751, %v821
      %823 = vdwg.mxu0
      %824 = vmatprep.subr.mxu0 %v492
      %825 = vmatpush1.msra.mxu0 %v491
      %826 = vmatprep.subr.mxu0 %v494
      %827 = vmatpush1.msra.mxu0 %v493
      %828 = vmatprep.subr.mxu0 %v496
      %829 = vmatpush1.msra.mxu0 %v495
      %830 = vmatprep.subr.mxu0 %v498
      %831 = vmatpush1.msra.mxu0 %v497
      %832 = vmatprep.subr.mxu0 %v500
      %833 = vmatpush1.msra.mxu0 %v499
      %834 = vmatprep.subr.mxu0 %v502
      %835 = vmatpush1.msra.mxu0 %v501
      %836 = vmatprep.subr.mxu0 %v504
      %837 = vmatpush1.msra.mxu0 %v503
      %838 = vmatprep.subr.mxu0 %v506
      %839 = vmatpush1.msra.mxu0 %v505
      %840 = vmatprep.subr.mxu0 %v508
      %841 = vmatpush1.msra.mxu0 %v507
      %842 = vmatprep.subr.mxu0 %v510
      %843 = vmatpush1.msra.mxu0 %v509
      %844 = vmatprep.subr.mxu0 %v512
      %845 = vmatpush1.msra.mxu0 %v511
      %846 = vmatprep.subr.mxu0 %v514
      %847 = vmatpush1.msra.mxu0 %v513
      %848 = vmatprep.subr.mxu0 %v516
      %849 = vmatpush1.msra.mxu0 %v515
      %850 = vmatprep.subr.mxu0 %v518
      %851 = vmatpush1.msra.mxu0 %v517
      %852 = vmatprep.subr.mxu0 %v520
      %853 = vmatpush1.msra.mxu0 %v519
      %854 = vmatprep.subr.mxu0 %v522
      %855 = vmatpush1.msra.mxu0 %v521
      %856 = vmatprep.subr.mxu0 %v524
      %857 = vmatpush1.msra.mxu0 %v523
      %858 = vmatprep.subr.mxu0 %v526
      %859 = vmatpush1.msra.mxu0 %v525
      %860 = vmatprep.subr.mxu0 %v528
      %861 = vmatpush1.msra.mxu0 %v527
      %862 = vmatprep.subr.mxu0 %v530
      %863 = vmatpush1.msra.mxu0 %v529
      %864 = vmatprep.subr.mxu0 %v532
      %865 = vmatpush1.msra.mxu0 %v531
      %866 = vmatprep.subr.mxu0 %v534
      %867 = vmatpush1.msra.mxu0 %v533
      %868 = vmatprep.subr.mxu0 %v536
      %869 = vmatpush1.msra.mxu0 %v535
      %870 = vmatprep.subr.mxu0 %v538
      %871 = vmatpush1.msra.mxu0 %v537
      %872 = vmatprep.subr.mxu0 %v540
      %873 = vmatpush1.msra.mxu0 %v539
      %874 = vmatprep.subr.mxu0 %v542
      %875 = vmatpush1.msra.mxu0 %v541
      %876 = vmatprep.subr.mxu0 %v544
      %877 = vmatpush1.msra.mxu0 %v543
      %878 = vmatprep.subr.mxu0 %v546
      %879 = vmatpush1.msra.mxu0 %v545
      %880 = vmatprep.subr.mxu0 %v548
      %881 = vmatpush1.msra.mxu0 %v547
      %882 = vmatprep.subr.mxu0 %v550
      %883 = vmatpush1.msra.mxu0 %v549
      %884 = vmatprep.subr.mxu0 %v552
      %885 = vmatpush1.msra.mxu0 %v551
      %886 = vmatprep.subr.mxu0 %v554
      %887 = vmatpush1.msra.mxu0 %v553
      %888 = vmatprep.mubr.f32.mxu0 %v602
      %889 = vmatmul.mubr.f32.gmra.mrb[0].mxu0 %v600
      %v890 = vpop.f32.mrb[0].mxu0
      %v891 = vadd.f32 %v820, %v890
      %v892 = vpop.f32.mrb[0].mxu0
      %v893 = vadd.f32 %v822, %v892
      %894 = vdwg.mxu0
      %v895 = vtanh.pop %v891
      %v896 = vtanh.pop %v893
      %v897 = vld [vmem:[#allocation8] sm:$0xff]
      %v898 = vld [vmem:[#allocation8 + $0x8] sm:$0xff]
      %v899 = vld [vmem:[#allocation8 + $0x10] sm:$0xff]
      %v900 = vld [vmem:[#allocation8 + $0x18] sm:$0xff]
      %v901 = vld [vmem:[#allocation8 + $0x20] sm:$0xff]
      %v902 = vld [vmem:[#allocation8 + $0x28] sm:$0xff]
      %v903 = vld [vmem:[#allocation8 + $0x30] sm:$0xff]
      %v904 = vld [vmem:[#allocation8 + $0x38] sm:$0xff]
      %v905 = vld [vmem:[#allocation8 + $0x40] sm:$0xff]
      %v906 = vld [vmem:[#allocation8 + $0x48] sm:$0xff]
      %v907 = vld [vmem:[#allocation8 + $0x50] sm:$0xff]
      %v908 = vld [vmem:[#allocation8 + $0x58] sm:$0xff]
      %v909 = vld [vmem:[#allocation8 + $0x60] sm:$0xff]
      %v910 = vld [vmem:[#allocation8 + $0x68] sm:$0xff]
      %v911 = vld [vmem:[#allocation8 + $0x70] sm:$0xff]
      %v912 = vld [vmem:[#allocation8 + $0x78] sm:$0xff]
      %v913 = vld [vmem:[#allocation8 + $0x80] sm:$0xff]
      %v914 = vld [vmem:[#allocation8 + $0x88] sm:$0xff]
      %v915 = vld [vmem:[#allocation8 + $0x90] sm:$0xff]
      %v916 = vld [vmem:[#allocation8 + $0x98] sm:$0xff]
      %v917 = vld [vmem:[#allocation8 + $0xa0] sm:$0xff]
      %v918 = vld [vmem:[#allocation8 + $0xa8] sm:$0xff]
      %v919 = vld [vmem:[#allocation8 + $0xb0] sm:$0xff]
      %v920 = vld [vmem:[#allocation8 + $0xb8] sm:$0xff]
      %v921 = vld [vmem:[#allocation8 + $0xc0] sm:$0xff]
      %v922 = vld [vmem:[#allocation8 + $0xc8] sm:$0xff]
      %v923 = vld [vmem:[#allocation8 + $0xd0] sm:$0xff]
      %v924 = vld [vmem:[#allocation8 + $0xd8] sm:$0xff]
      %v925 = vld [vmem:[#allocation8 + $0xe0] sm:$0xff]
      %v926 = vld [vmem:[#allocation8 + $0xe8] sm:$0xff]
      %v927 = vld [vmem:[#allocation8 + $0xf0] sm:$0xff]
      %v928 = vld [vmem:[#allocation8 + $0xf8] sm:$0xff]
      %v929 = vld [vmem:[%s4] sm:$0x1]
      %v931 = vlaneseq
      %v932 = vshrl.u32 %v931, 7
      %v933 = vsub.s32 0, %v932
      %v934 = vrot.slane %v929, %v933
      %936 = vmatprep.subr.mxu0 0.0
      %937 = vmatpush1.msra.mxu0 %v897
      %938 = vmatprep.subr.mxu0 0.0
      %939 = vmatpush1.msra.mxu0 %v898
      %940 = vmatprep.subr.mxu0 0.0
      %941 = vmatpush1.msra.mxu0 %v899
      %942 = vmatprep.subr.mxu0 0.0
      %943 = vmatpush1.msra.mxu0 %v900
      %944 = vmatprep.subr.mxu0 0.0
      %945 = vmatpush1.msra.mxu0 %v901
      %946 = vmatprep.subr.mxu0 0.0
      %947 = vmatpush1.msra.mxu0 %v902
      %948 = vmatprep.subr.mxu0 0.0
      %949 = vmatpush1.msra.mxu0 %v903
      %950 = vmatprep.subr.mxu0 0.0
      %951 = vmatpush1.msra.mxu0 %v904
      %952 = vmatprep.subr.mxu0 0.0
      %953 = vmatpush1.msra.mxu0 %v905
      %954 = vmatprep.subr.mxu0 0.0
      %955 = vmatpush1.msra.mxu0 %v906
      %956 = vmatprep.subr.mxu0 0.0
      %957 = vmatpush1.msra.mxu0 %v907
      %958 = vmatprep.subr.mxu0 0.0
      %959 = vmatpush1.msra.mxu0 %v908
      %960 = vmatprep.subr.mxu0 0.0
      %961 = vmatpush1.msra.mxu0 %v909
      %962 = vmatprep.subr.mxu0 0.0
      %963 = vmatpush1.msra.mxu0 %v910
      %964 = vmatprep.subr.mxu0 0.0
      %965 = vmatpush1.msra.mxu0 %v911
      %966 = vmatprep.subr.mxu0 0.0
      %967 = vmatpush1.msra.mxu0 %v912
      %968 = vmatprep.subr.mxu0 0.0
      %969 = vmatpush1.msra.mxu0 %v913
      %970 = vmatprep.subr.mxu0 0.0
      %971 = vmatpush1.msra.mxu0 %v914
      %972 = vmatprep.subr.mxu0 0.0
      %973 = vmatpush1.msra.mxu0 %v915
      %974 = vmatprep.subr.mxu0 0.0
      %975 = vmatpush1.msra.mxu0 %v916
      %976 = vmatprep.subr.mxu0 0.0
      %977 = vmatpush1.msra.mxu0 %v917
      %978 = vmatprep.subr.mxu0 0.0
      %979 = vmatpush1.msra.mxu0 %v918
      %980 = vmatprep.subr.mxu0 0.0
      %981 = vmatpush1.msra.mxu0 %v919
      %982 = vmatprep.subr.mxu0 0.0
      %983 = vmatpush1.msra.mxu0 %v920
      %984 = vmatprep.subr.mxu0 0.0
      %985 = vmatpush1.msra.mxu0 %v921
      %986 = vmatprep.subr.mxu0 0.0
      %987 = vmatpush1.msra.mxu0 %v922
      %988 = vmatprep.subr.mxu0 0.0
      %989 = vmatpush1.msra.mxu0 %v923
      %990 = vmatprep.subr.mxu0 0.0
      %991 = vmatpush1.msra.mxu0 %v924
      %992 = vmatprep.subr.mxu0 0.0
      %993 = vmatpush1.msra.mxu0 %v925
      %994 = vmatprep.subr.mxu0 0.0
      %995 = vmatpush1.msra.mxu0 %v926
      %996 = vmatprep.subr.mxu0 0.0
      %997 = vmatpush1.msra.mxu0 %v927
      %998 = vmatprep.subr.mxu0 0.0
      %999 = vmatpush1.msra.mxu0 %v928
      %1000 = vmatprep.mubr.f32.mxu0 %v896
      %1001 = vmatmul.mubr.f32.gmra.mrb[0].mxu0 %v895
      %v1002 = vpop.f32.mrb[0].mxu0
      %v1003 = vadd.f32 %v934, %v1002
      %v1004 = vpop.f32.mrb[0].mxu0
      %1005 = vdwg.mxu0
      %v1006 = vlaneseq
      %v1007 = vand.u32 %v1006, 127
      %vm1008 = vcmp.lt.s32.totalorder %v1007, 2
      %v1009 = vsel %vm1008, %v1003, -inf
      %vm1010 = vcmask 1041408
      %v1011 = vsel %vm1010, %v1009, -inf
      %1012 = vmax.xlane.f32.xlu0 %v1011
      %v1013 = vpop.xlane.xlu0 %1012
      %v1014 = vsub.f32 %v1009, %v1013
      %v1015 = vmul.f32 %v1014, 1.442695
      %v1016 = vpow.pop %v1015
      %v1017 = vsel %vm1010, %v1016, 0.0
      %1018 = vadd.xlane.f32.xlu0 %v1017
      %v1019 = vpop.xlane.xlu0 %1018
      %v1020 = vlog2.pop %v1019
      %v1021 = vmul.f32 %v1020, 0.6931472
      %v1022 = vsub.f32 %v1014, %v1021
      %1023 = vst [vmem:[#allocation9] sm:$0x3] %v1022
    $region41: #{tpu_custom_call.1} parent=1 // pred_fallthru
      _
    // Predicated region
    $region42: #{tpu_custom_call.1} parent=1 // pred_check
      _
    $region43: #{tpu_custom_call.1} parent=1 // pred_check_branch
      %1025 = sbr.rel (0) target = $region45
    $region44: #{tpu_custom_call.1} parent=1 // pred_region
      %s1027 = ssub.s32 32, 32
      %1028 = vsyncadd [#allocation5], %s1027
      %s1030 = sshll.u32 [#allocation9], 4
      %s1031 = int_to_ptr.vmem [resolvable:$true] %s1030
      %1033 = dma.vmem_to_hbm [thread:$0]  %s1031, 32, %s5, [#allocation5]
    $region45: #{tpu_custom_call.1} parent=1 // pred_fallthru
      _
    // Predicated region
    $region46: #{tpu_custom_call.1} parent=1 // pred_check
      _
    $region47: #{tpu_custom_call.1} parent=1 // pred_check_branch
      %1035 = sbr.rel (0) target = $region49
    $region48: #{tpu_custom_call.1} parent=1 // pred_region
      %1036 = dma.done [#allocation5], 32
    $region49: #{tpu_custom_call.1} parent=1 // pred_fallthru
      _
    %1037 = vsyncpa [#allocation4], 1
    %1038 = vsyncpa [#allocation7], 1
    %1039 = vsyncpa [#allocation5], 1

</llo_original>
